<compile_context>
chip_gen: v7x
topology: tpu7x:2x2x1
jax: 0.10.0
libtpu: 0.0.40
codegen_flags: <defaults>
</compile_context>

<pallas_src>
import functools

import jax
import jax.numpy as jnp
from jax import lax
from jax.experimental import pallas as pl
from jax.experimental.pallas import tpu as pltpu


def _temporal_block_kernel(x_ref, w1_ref, b1_ref, w2_ref, b2_ref, wd_ref, bd_ref,
                           out_ref, *, K, dilation, BB, L):
    """Fused TemporalBlock forward for one block of BB complete sequences.

    x_ref  : (BB, L, Cin)    f32 input slice (time-major, channels-last)
    w1_ref : (K*Cin, Cout)   bf16 conv1 taps, tap-major flattened (already weight-normed)
    b1_ref : (1, Cout)       f32
    w2_ref : (K*Cout, Cout)  bf16 conv2 taps
    b2_ref : (1, Cout)       f32
    wd_ref : (Cin, Cout)     bf16 1x1 downsample conv
    bd_ref : (1, Cout)       f32
    out_ref: (BB, L, Cout)   f32
    """
    pad = dilation * (K - 1)
    x = x_ref[...].astype(jnp.float32)                       # (BB, L, Cin)

    def causal_dilated_conv(h, w_flat_ref, b_ref):
        # h: (BB, L, C).  Zero-pad the time head once; the K dilated causal taps are
        # then static slices.  Stacking the taps along channels turns K small per-tap
        # matmuls into ONE MXU contraction of depth K*C (fewer MRF pops, fewer VPU adds).
        c = h.shape[-1]
        hp = jnp.concatenate([jnp.zeros((BB, pad, c), jnp.float32), h], axis=1)
        slab = jnp.concatenate(
            [hp[:, dilation * j: dilation * j + L, :] for j in range(K)], axis=-1)
        slab = slab.reshape(BB * L, K * c).astype(jnp.bfloat16)   # bf16 MXU inputs
        y = jnp.dot(slab, w_flat_ref[...], preferred_element_type=jnp.float32)
        return y + b_ref[...]                                  # (BB*L, Cout), f32 accumulate

    h1 = jnp.maximum(causal_dilated_conv(x, w1_ref, b1_ref), 0.0)
    # TODO(synk): dropout1/dropout2 are identity here (eval-mode); stochastic training
    # dropout is not implemented.
    cout = out_ref.shape[-1]
    h2 = jnp.maximum(causal_dilated_conv(h1.reshape(BB, L, cout), w2_ref, b2_ref), 0.0)

    res = jnp.dot(x.reshape(BB * L, -1).astype(jnp.bfloat16), wd_ref[...],
                  preferred_element_type=jnp.float32) + bd_ref[...]
    out_ref[...] = jnp.maximum(h2 + res, 0.0).reshape(BB, L, cout).astype(out_ref.dtype)


def _choose_batch_block(B, L, Cin, Cout, K, *, target_rows=512,
                        vmem_budget_bytes=8 * 1024 * 1024):
    """Largest divisor BB of B such that BB*L rows feed the MXU well while the per-step
    f32 working set stays far under the (v7x-safe) scoped-VMEM budget, keeping >= 2
    parallel grid blocks when B allows (so both v7x TensorCores get work)."""
    cap = B // 2 if B >= 2 else 1
    best = 1
    for bb in range(1, cap + 1):
        if B % bb:
            continue
        rows = bb * L
        work = rows * (Cin + K * Cin + (K + 3) * Cout) * 4   # in-kernel f32 intermediates
        io = 2 * rows * (Cin + Cout) * 4                     # double-buffered I/O blocks
        if rows <= target_rows and work + io <= vmem_budget_bytes:
            best = bb
    return best
    # TODO(synk): for very long L the time axis should additionally be tiled with a
    # 2*(K-1)*dilation history halo (conv1->conv2 are fused); not needed at these sizes.


def temporal_block_forward(x_blc, w1_flat, b1, w2_flat, b2, wd_io, bd, *, K, dilation):
    """x_blc: (B, L, Cin) f32.  Weight slabs already weight-normalized, flattened, bf16."""
    B, L, Cin = x_blc.shape
    Cout = w1_flat.shape[1]
    BB = _choose_batch_block(B, L, Cin, Cout, K)

    b1 = b1.reshape(1, Cout).astype(jnp.float32)
    b2 = b2.reshape(1, Cout).astype(jnp.float32)
    bd = bd.reshape(1, Cout).astype(jnp.float32)

    kernel = functools.partial(_temporal_block_kernel, K=K, dilation=dilation, BB=BB, L=L)

    grid_spec = pltpu.PrefetchScalarGridSpec(
        num_scalar_prefetch=0,
        grid=(B // BB,),
        in_specs=[
            pl.BlockSpec((BB, L, Cin), lambda b: (b, 0, 0)),
            pl.BlockSpec((K * Cin, Cout), lambda b: (0, 0)),   # weights: grid-invariant blocks
            pl.BlockSpec((1, Cout), lambda b: (0, 0)),
            pl.BlockSpec((K * Cout, Cout), lambda b: (0, 0)),
            pl.BlockSpec((1, Cout), lambda b: (0, 0)),
            pl.BlockSpec((Cin, Cout), lambda b: (0, 0)),
            pl.BlockSpec((1, Cout), lambda b: (0, 0)),
        ],
        out_specs=pl.BlockSpec((BB, L, Cout), lambda b: (b, 0, 0)),
    )

    return pl.pallas_call(
        kernel,
        out_shape=jax.ShapeDtypeStruct((B, L, Cout), jnp.float32),
        grid_spec=grid_spec,
        compiler_params=pltpu.CompilerParams(
            dimension_semantics=("parallel",),
            # Explicit VMEM budget: safe on v5e/v6e/v7x; block sizes are capped well below.
            vmem_limit_bytes=32 * 1024 * 1024,
        ),
    )(x_blc, w1_flat, b1, w2_flat, b2, wd_io, bd)


def temporal_block_apply(x_ncl, w1_oik, b1, w2_oik, b2, wd_oi, bd, *, K, dilation):
    """PyTorch-facing entry.  x: (B, Cin, L) NCL; conv weights (Cout, Cin, K) already
    weight-normalized; downsample (Cout, Cin).  Returns (B, Cout, L)."""
    Cout, Cin, _ = w1_oik.shape
    # One-time layout plumbing: tap-major flattened bf16 weight slabs so the kernel does
    # a single (rows, K*C) @ (K*C, Cout) MXU matmul per conv layer.
    w1_flat = jnp.transpose(w1_oik, (2, 1, 0)).reshape(K * Cin, Cout).astype(jnp.bfloat16)
    w2_flat = jnp.transpose(w2_oik, (2, 1, 0)).reshape(K * Cout, Cout).astype(jnp.bfloat16)
    wd_io = wd_oi.T.astype(jnp.bfloat16)
    x_blc = jnp.transpose(x_ncl, (0, 2, 1))
    out_blc = temporal_block_forward(x_blc, w1_flat, b1, w2_flat, b2, wd_io, bd,
                                     K=K, dilation=dilation)
    return jnp.transpose(out_blc, (0, 2, 1))


def _weight_norm(v, g):
    # PyTorch weight_norm(dim=0): w = g * v / ||v||, norm over all dims but 0.
    norm = jnp.sqrt(jnp.sum(v * v, axis=tuple(range(1, v.ndim)), keepdims=True))
    return g.reshape((-1,) + (1,) * (v.ndim - 1)) * v / norm


def _reference_forward(x_ncl, w1, b1, w2, b2, wd, bd, pad, dilation):
    """Pure-JAX f32 reference mirroring the PyTorch forward (NCL layout)."""
    L = x_ncl.shape[2]

    def conv1d(x, w, b, p, d):
        y = lax.conv_general_dilated(
            x, w, window_strides=(1,), padding=[(p, p)], rhs_dilation=(d,),
            dimension_numbers=("NCH", "OIH", "NCH"),
            precision=lax.Precision.HIGHEST)
        return y + b[None, :, None]

    h = jnp.maximum(conv1d(x_ncl, w1, b1, pad, dilation)[:, :, :L], 0.0)   # chomp + relu
    h = jnp.maximum(conv1d(h, w2, b2, pad, dilation)[:, :, :L], 0.0)
    res = conv1d(x_ncl, wd[:, :, None], bd, 0, 1)
    return jnp.maximum(h + res, 0.0)


if __name__ == "__main__":
    # Config consistent with TemporalBlock(n_inputs=32, n_outputs=64, kernel_size=3,
    #                                      stride=1, dilation=2, padding=(3-1)*2)
    B, L, Cin, Cout, K, dil = 16, 16, 32, 64, 3, 2
    pad = (K - 1) * dil

    key = jax.random.PRNGKey(0)
    ks = jax.random.split(key, 9)

    # Deterministic synthetic params (shapes from __init__); weight_norm applied in glue.
    v1 = 0.01 * jax.random.normal(ks[0], (Cout, Cin, K), jnp.float32)
    g1 = 1.0 + 0.1 * jax.random.normal(ks[1], (Cout,), jnp.float32)
    w1 = _weight_norm(v1, g1)                                   # (Cout, Cin, K)
    b1 = 0.05 * jax.random.normal(ks[2], (Cout,), jnp.float32)

    v2 = 0.01 * jax.random.normal(ks[3], (Cout, Cout, K), jnp.float32)
    g2 = 1.0 + 0.1 * jax.random.normal(ks[4], (Cout,), jnp.float32)
    w2 = _weight_norm(v2, g2)                                   # (Cout, Cout, K)
    b2 = 0.05 * jax.random.normal(ks[5], (Cout,), jnp.float32)

    wd = 0.01 * jax.random.normal(ks[6], (Cout, Cin), jnp.float32)   # downsample (1x1 conv)
    bd = 0.05 * jax.random.normal(ks[7], (Cout,), jnp.float32)

    x_ncl = jax.random.normal(ks[8], (B, Cin, L), jnp.float32)

    out_ncl = jax.block_until_ready(
        temporal_block_apply(x_ncl, w1, b1, w2, b2, wd, bd, K=K, dilation=dil))

    # Validate against a pure-JAX f32 reference mirroring the PyTorch module.
    # The kernel feeds the MXU bf16 inputs with f32 accumulation, so allow ~1%-level slack.
    ref_ncl = _reference_forward(x_ncl, w1, b1, w2, b2, wd, bd, pad, dil)
    assert out_ncl.shape == ref_ncl.shape == (B, Cout, L)
    max_err = float(jnp.max(jnp.abs(out_ncl - ref_ncl)))
    assert jnp.allclose(out_ncl, ref_ncl, atol=3e-2, rtol=3e-2), max_err

    print("KERNEL_OK")
</pallas_src>

<mosaic_0001>
module attributes {stable_mosaic.version = 11 : i64} {
  func.func @_temporal_block_kernel(%arg0: i32, %arg1: memref<8x16x32xf32, #tpu.memory_space<vmem>>, %arg2: memref<96x64xbf16, #tpu.memory_space<vmem>>, %arg3: memref<1x64xf32, #tpu.memory_space<vmem>>, %arg4: memref<192x64xbf16, #tpu.memory_space<vmem>>, %arg5: memref<1x64xf32, #tpu.memory_space<vmem>>, %arg6: memref<32x64xbf16, #tpu.memory_space<vmem>>, %arg7: memref<1x64xf32, #tpu.memory_space<vmem>>, %arg8: memref<8x16x64xf32, #tpu.memory_space<vmem>>) attributes {dimension_semantics = [#tpu.dimension_semantics<parallel>], iteration_bounds = array<i64: 2>, scalar_prefetch = 0 : i64, scratch_operands = 0 : i64, tpu.core_type = #tpu.core_type<tc>, window_params = [{transform_indices = @transform_0, window_bounds = array<i64: 8, 16, 32>}, {pipeline_mode = #tpu.pipeline_mode<synchronous>, transform_indices = @transform_1, window_bounds = array<i64: 96, 64>}, {pipeline_mode = #tpu.pipeline_mode<synchronous>, transform_indices = @transform_2, window_bounds = array<i64: 1, 64>}, {pipeline_mode = #tpu.pipeline_mode<synchronous>, transform_indices = @transform_3, window_bounds = array<i64: 192, 64>}, {pipeline_mode = #tpu.pipeline_mode<synchronous>, transform_indices = @transform_4, window_bounds = array<i64: 1, 64>}, {pipeline_mode = #tpu.pipeline_mode<synchronous>, transform_indices = @transform_5, window_bounds = array<i64: 32, 64>}, {pipeline_mode = #tpu.pipeline_mode<synchronous>, transform_indices = @transform_6, window_bounds = array<i64: 1, 64>}, {transform_indices = @transform_7, window_bounds = array<i64: 8, 16, 64>}]} {
    %c0 = arith.constant 0 : index
    %c0_0 = arith.constant 0 : index
    %c0_1 = arith.constant 0 : index
    %0 = vector.load %arg1[%c0, %c0_0, %c0_1] : memref<8x16x32xf32, #tpu.memory_space<vmem>>, vector<8x16x32xf32>
    %cst = arith.constant 0.000000e+00 : f32
    %1 = vector.broadcast %cst : f32 to vector<8x4x32xf32>
    %2 = tpu.concatenate %1, %0 in 1 : vector<8x4x32xf32>, vector<8x16x32xf32> -> vector<8x20x32xf32>
    %3 = vector.extract_strided_slice %2 {offsets = [0, 0, 0], sizes = [8, 16, 32], strides = [1, 1, 1]} : vector<8x20x32xf32> to vector<8x16x32xf32>
    %4 = vector.extract_strided_slice %2 {offsets = [0, 2, 0], sizes = [8, 16, 32], strides = [1, 1, 1]} : vector<8x20x32xf32> to vector<8x16x32xf32>
    %5 = vector.extract_strided_slice %2 {offsets = [0, 4, 0], sizes = [8, 16, 32], strides = [1, 1, 1]} : vector<8x20x32xf32> to vector<8x16x32xf32>
    %6 = tpu.concatenate %3, %4, %5 in 2 : vector<8x16x32xf32>, vector<8x16x32xf32>, vector<8x16x32xf32> -> vector<8x16x96xf32>
    %7 = vector.shape_cast %6 : vector<8x16x96xf32> to vector<128x96xf32>
    %8 = arith.truncf %7 : vector<128x96xf32> to vector<128x96xbf16>
    %c0_2 = arith.constant 0 : index
    %c0_3 = arith.constant 0 : index
    %9 = vector.load %arg2[%c0_2, %c0_3] : memref<96x64xbf16, #tpu.memory_space<vmem>>, vector<96x64xbf16>
    %cst_4 = arith.constant dense<0.000000e+00> : vector<128x64xf32>
    %10 = tpu.matmul %8, %9, %cst_4 {dimension_numbers = #tpu.dot_dimension_numbers<[1], [0], [0], [1], [0, 0, 1, 1], [], []>} : vector<128x96xbf16>, vector<96x64xbf16>, vector<128x64xf32> -> vector<128x64xf32>
    %c0_5 = arith.constant 0 : index
    %c0_6 = arith.constant 0 : index
    %11 = vector.load %arg3[%c0_5, %c0_6] : memref<1x64xf32, #tpu.memory_space<vmem>>, vector<1x64xf32>
    %12 = vector.broadcast %11 : vector<1x64xf32> to vector<128x64xf32>
    %13 = arith.addf %10, %12 : vector<128x64xf32>
    %cst_7 = arith.constant 0.000000e+00 : f32
    %14 = vector.broadcast %cst_7 : f32 to vector<128x64xf32>
    %15 = arith.maximumf %13, %14 : vector<128x64xf32>
    %16 = vector.shape_cast %15 : vector<128x64xf32> to vector<8x16x64xf32>
    %cst_8 = arith.constant 0.000000e+00 : f32
    %17 = vector.broadcast %cst_8 : f32 to vector<8x4x64xf32>
    %18 = tpu.concatenate %17, %16 in 1 : vector<8x4x64xf32>, vector<8x16x64xf32> -> vector<8x20x64xf32>
    %19 = vector.extract_strided_slice %18 {offsets = [0, 0, 0], sizes = [8, 16, 64], strides = [1, 1, 1]} : vector<8x20x64xf32> to vector<8x16x64xf32>
    %20 = vector.extract_strided_slice %18 {offsets = [0, 2, 0], sizes = [8, 16, 64], strides = [1, 1, 1]} : vector<8x20x64xf32> to vector<8x16x64xf32>
    %21 = vector.extract_strided_slice %18 {offsets = [0, 4, 0], sizes = [8, 16, 64], strides = [1, 1, 1]} : vector<8x20x64xf32> to vector<8x16x64xf32>
    %22 = tpu.concatenate %19, %20, %21 in 2 : vector<8x16x64xf32>, vector<8x16x64xf32>, vector<8x16x64xf32> -> vector<8x16x192xf32>
    %23 = vector.shape_cast %22 : vector<8x16x192xf32> to vector<128x192xf32>
    %24 = arith.truncf %23 : vector<128x192xf32> to vector<128x192xbf16>
    %c0_9 = arith.constant 0 : index
    %c0_10 = arith.constant 0 : index
    %25 = vector.load %arg4[%c0_9, %c0_10] : memref<192x64xbf16, #tpu.memory_space<vmem>>, vector<192x64xbf16>
    %cst_11 = arith.constant dense<0.000000e+00> : vector<128x64xf32>
    %26 = tpu.matmul %24, %25, %cst_11 {dimension_numbers = #tpu.dot_dimension_numbers<[1], [0], [0], [1], [0, 0, 1, 1], [], []>} : vector<128x192xbf16>, vector<192x64xbf16>, vector<128x64xf32> -> vector<128x64xf32>
    %c0_12 = arith.constant 0 : index
    %c0_13 = arith.constant 0 : index
    %27 = vector.load %arg5[%c0_12, %c0_13] : memref<1x64xf32, #tpu.memory_space<vmem>>, vector<1x64xf32>
    %28 = vector.broadcast %27 : vector<1x64xf32> to vector<128x64xf32>
    %29 = arith.addf %26, %28 : vector<128x64xf32>
    %cst_14 = arith.constant 0.000000e+00 : f32
    %30 = vector.broadcast %cst_14 : f32 to vector<128x64xf32>
    %31 = arith.maximumf %29, %30 : vector<128x64xf32>
    %32 = vector.shape_cast %0 : vector<8x16x32xf32> to vector<128x32xf32>
    %33 = arith.truncf %32 : vector<128x32xf32> to vector<128x32xbf16>
    %c0_15 = arith.constant 0 : index
    %c0_16 = arith.constant 0 : index
    %34 = vector.load %arg6[%c0_15, %c0_16] : memref<32x64xbf16, #tpu.memory_space<vmem>>, vector<32x64xbf16>
    %cst_17 = arith.constant dense<0.000000e+00> : vector<128x64xf32>
    %35 = tpu.matmul %33, %34, %cst_17 {dimension_numbers = #tpu.dot_dimension_numbers<[1], [0], [0], [1], [0, 0, 1, 1], [], []>} : vector<128x32xbf16>, vector<32x64xbf16>, vector<128x64xf32> -> vector<128x64xf32>
    %c0_18 = arith.constant 0 : index
    %c0_19 = arith.constant 0 : index
    %36 = vector.load %arg7[%c0_18, %c0_19] : memref<1x64xf32, #tpu.memory_space<vmem>>, vector<1x64xf32>
    %37 = vector.broadcast %36 : vector<1x64xf32> to vector<128x64xf32>
    %38 = arith.addf %35, %37 : vector<128x64xf32>
    %39 = arith.addf %31, %38 : vector<128x64xf32>
    %cst_20 = arith.constant 0.000000e+00 : f32
    %40 = vector.broadcast %cst_20 : f32 to vector<128x64xf32>
    %41 = arith.maximumf %39, %40 : vector<128x64xf32>
    %42 = vector.shape_cast %41 : vector<128x64xf32> to vector<8x16x64xf32>
    %c0_21 = arith.constant 0 : index
    %c0_22 = arith.constant 0 : index
    %c0_23 = arith.constant 0 : index
    %43 = vector.load %arg8[%c0_21, %c0_22, %c0_23] : memref<8x16x64xf32, #tpu.memory_space<vmem>>, vector<8x16x64xf32>
    tpu.vector_store %arg8[%c0_21, %c0_22, %c0_23], %42 {strides = array<i32>} : memref<8x16x64xf32, #tpu.memory_space<vmem>>, vector<8x16x64xf32>,
    return
  }
  func.func @transform_0(%arg0: i32) -> (i32, i32, i32) {
    %c0_i32 = arith.constant 0 : i32
    %c0_i32_0 = arith.constant 0 : i32
    %c0_i32_1 = arith.constant 0 : i32
    return %arg0, %c0_i32, %c0_i32_0 : i32, i32, i32
  }
  func.func @transform_1(%arg0: i32) -> (i32, i32) {
    %c0_i32 = arith.constant 0 : i32
    %c0_i32_0 = arith.constant 0 : i32
    %c0_i32_1 = arith.constant 0 : i32
    return %c0_i32, %c0_i32_0 : i32, i32
  }
  func.func @transform_2(%arg0: i32) -> (i32, i32) {
    %c0_i32 = arith.constant 0 : i32
    %c0_i32_0 = arith.constant 0 : i32
    %c0_i32_1 = arith.constant 0 : i32
    return %c0_i32, %c0_i32_0 : i32, i32
  }
  func.func @transform_3(%arg0: i32) -> (i32, i32) {
    %c0_i32 = arith.constant 0 : i32
    %c0_i32_0 = arith.constant 0 : i32
    %c0_i32_1 = arith.constant 0 : i32
    return %c0_i32, %c0_i32_0 : i32, i32
  }
  func.func @transform_4(%arg0: i32) -> (i32, i32) {
    %c0_i32 = arith.constant 0 : i32
    %c0_i32_0 = arith.constant 0 : i32
    %c0_i32_1 = arith.constant 0 : i32
    return %c0_i32, %c0_i32_0 : i32, i32
  }
  func.func @transform_5(%arg0: i32) -> (i32, i32) {
    %c0_i32 = arith.constant 0 : i32
    %c0_i32_0 = arith.constant 0 : i32
    %c0_i32_1 = arith.constant 0 : i32
    return %c0_i32, %c0_i32_0 : i32, i32
  }
  func.func @transform_6(%arg0: i32) -> (i32, i32) {
    %c0_i32 = arith.constant 0 : i32
    %c0_i32_0 = arith.constant 0 : i32
    %c0_i32_1 = arith.constant 0 : i32
    return %c0_i32, %c0_i32_0 : i32, i32
  }
  func.func @transform_7(%arg0: i32) -> (i32, i32, i32) {
    %c0_i32 = arith.constant 0 : i32
    %c0_i32_0 = arith.constant 0 : i32
    %c0_i32_1 = arith.constant 0 : i32
    return %arg0, %c0_i32, %c0_i32_0 : i32, i32, i32
  }
}

</mosaic_0001>

<llo_original>
// kernel: tpu_custom_call.1
$region0: #{tpu_custom_call.1}
  #allocation0 [shape = 'u32[]', space=smem, size = 0x4, offset = 0x4, fixed_abs, tag = 'smem constant byte address 0x4 - core index']
  #allocation1 [shape = 'u32[144,128]{1,0:T(1,128)}', space=vmem, size = 0x12000, scoped, tag = 'internal scratch']
  %s0 = inlined_call_operand.hbm [shape: f32[16,16,32], index: 0, kind: input, shape index: {}]
  %s1 = inlined_call_operand.vmem [shape: bf16[96,64], index: 1, kind: input, shape index: {}]
  %s2 = inlined_call_operand.vmem [shape: f32[1,64], index: 2, kind: input, shape index: {}]
  %s3 = inlined_call_operand.vmem [shape: bf16[192,64], index: 3, kind: input, shape index: {}]
  %s4 = inlined_call_operand.vmem [shape: f32[1,64], index: 4, kind: input, shape index: {}]
  %s5 = inlined_call_operand.vmem [shape: bf16[32,64], index: 5, kind: input, shape index: {}]
  %s6 = inlined_call_operand.vmem [shape: f32[1,64], index: 6, kind: input, shape index: {}]
  %s7 = inlined_call_operand.hbm [shape: f32[16,16,64], index: 7, kind: output, shape index: {}]
  %s8 = sld [smem:[#allocation0]]
  $region65: #{tpu_custom_call.1} parent=0
    _
  %s10 = ssub.s32 1, %s8
  %s11 = scalar_select 0, %s10, %s8
  $region1: #{tpu_custom_call.1} parent=0
    #allocation2 [shape = 'u8[131072]{0}', space=vmem, size = 0x20000, scoped, tag = 'input window, operand 0']
    #allocation3 [shape = 's32[2]{0}', space=sflag, size = 0x8, scoped, tag = 'scoped memory for tpu_custom_call.1']
    #allocation4 [shape = 's32[2]{0}', space=sflag, size = 0x8, scoped, tag = 'scoped memory for tpu_custom_call.1']
    #allocation5 [shape = 'u8[131072]{0}', space=vmem, size = 0x20000, scoped, tag = 'output window, operand 0']
    %12 = vsyncpa [#allocation3], 0
    %s13 = scalar_lea.sflag [#allocation3], 1
    %14 = vsyncpa %s13, 0
    %15 = vsyncpa [#allocation4], 0
    %s16 = scalar_lea.sflag [#allocation4], 1
    %17 = vsyncpa %s16, 0
    loop: start=0, step=1, limit=4
    $region2: #{tpu_custom_call.1} parent=1 // loop_pre_header
      _
    $region3: #{tpu_custom_call.1} parent=1 // loop_header
      %s19 = sphi 0, %s23
      %p20 = scmp.ge.s32.totalorder %s19, 4
      %s29 = sphi 0, %s31
      %s32 = sphi 0, %s29
      %s33 = sphi 0, %s32
      %s49 = sphi 0, %s33
      %s53 = sphi 0, %s53
      %s55 = sphi 0, %s53
      %s56 = sphi 0, %s55
      %s70 = sphi 0, %s56
      %s74 = sphi 0, %s74
      %s76 = sphi 0, %s74
      %s77 = sphi 0, %s76
      %s91 = sphi 0, %s77
      %s95 = sphi 0, %s95
      %s97 = sphi 0, %s95
      %s98 = sphi 0, %s97
      %s112 = sphi 0, %s98
      %s116 = sphi 0, %s116
      %s118 = sphi 0, %s116
      %s119 = sphi 0, %s118
      %s133 = sphi 0, %s119
      %s137 = sphi 0, %s137
      %s139 = sphi 0, %s137
      %s140 = sphi 0, %s139
      %s154 = sphi 0, %s140
      %s158 = sphi 0, %s158
      %s160 = sphi 0, %s158
      %s161 = sphi 0, %s160
      %s175 = sphi 0, %s161
      %s181 = sphi 0, %s183
      %s184 = sphi 0, %s181
      %s185 = sphi 0, %s184
      %s201 = sphi 0, %s185
    $region4: #{tpu_custom_call.1} parent=1 // loop_header_branch
      %22 = sbr.rel (%p20) target = $region8
    $region5: #{tpu_custom_call.1} parent=1 // loop_body
      %s24 = ssub.s32 %s19, 1
      %s25 = ssub.s32 %s19, 2
      %s26 = sadd.s32 %s19, 1
      %s27 = ssub.s32 %s19, %s26
      %p28 = scmp.eq.s32.totalorder %s27, 0
      %s30 = sadd.s32 %s29, 1
      %s31 = scalar_select %p28, %s29, %s30
      %p34 = pneg %p28
      %p35 = scmp.eq.s32.totalorder %s19, 1
      %p36 = por %p34, %p35
      %p37 = scmp.ne.s32.totalorder %s29, %s32
      %p38 = scmp.eq.s32.totalorder %s19, 0
      %p39 = por %p37, %p38
      %p40 = scmp.ne.s32.totalorder %s29, %s32
      %p41 = scmp.eq.s32.totalorder %s24, 1
      %p42 = por %p40, %p41
      %p43 = scmp.ne.s32.totalorder %s32, %s33
      %p44 = scmp.eq.s32.totalorder %s24, 0
      %p45 = por %p43, %p44
      %p46 = scmp.ne.s32.totalorder %s32, %s33
      %p47 = scmp.eq.s32.totalorder %s25, 1
      %p48 = por %p46, %p47
      %p50 = scmp.ne.s32.totalorder %s33, %s49
      %p51 = scmp.eq.s32.totalorder %s25, 0
      %p52 = por %p50, %p51
      %s54 = sadd.s32 %s53, 1
      %p57 = scmp.eq.s32.totalorder %s19, 1
      %p58 = scmp.ne.s32.totalorder %s53, %s55
      %p59 = scmp.eq.s32.totalorder %s19, 0
      %p60 = por %p58, %p59
      %p61 = scmp.ne.s32.totalorder %s53, %s55
      %p62 = scmp.eq.s32.totalorder %s24, 1
      %p63 = por %p61, %p62
      %p64 = scmp.ne.s32.totalorder %s55, %s56
      %p65 = scmp.eq.s32.totalorder %s24, 0
      %p66 = por %p64, %p65
      %p67 = scmp.ne.s32.totalorder %s55, %s56
      %p68 = scmp.eq.s32.totalorder %s25, 1
      %p69 = por %p67, %p68
      %p71 = scmp.ne.s32.totalorder %s56, %s70
      %p72 = scmp.eq.s32.totalorder %s25, 0
      %p73 = por %p71, %p72
      %s75 = sadd.s32 %s74, 1
      %p78 = scmp.eq.s32.totalorder %s19, 1
      %p79 = scmp.ne.s32.totalorder %s74, %s76
      %p80 = scmp.eq.s32.totalorder %s19, 0
      %p81 = por %p79, %p80
      %p82 = scmp.ne.s32.totalorder %s74, %s76
      %p83 = scmp.eq.s32.totalorder %s24, 1
      %p84 = por %p82, %p83
      %p85 = scmp.ne.s32.totalorder %s76, %s77
      %p86 = scmp.eq.s32.totalorder %s24, 0
      %p87 = por %p85, %p86
      %p88 = scmp.ne.s32.totalorder %s76, %s77
      %p89 = scmp.eq.s32.totalorder %s25, 1
      %p90 = por %p88, %p89
      %p92 = scmp.ne.s32.totalorder %s77, %s91
      %p93 = scmp.eq.s32.totalorder %s25, 0
      %p94 = por %p92, %p93
      %s96 = sadd.s32 %s95, 1
      %p99 = scmp.eq.s32.totalorder %s19, 1
      %p100 = scmp.ne.s32.totalorder %s95, %s97
      %p101 = scmp.eq.s32.totalorder %s19, 0
      %p102 = por %p100, %p101
      %p103 = scmp.ne.s32.totalorder %s95, %s97
      %p104 = scmp.eq.s32.totalorder %s24, 1
      %p105 = por %p103, %p104
      %p106 = scmp.ne.s32.totalorder %s97, %s98
      %p107 = scmp.eq.s32.totalorder %s24, 0
      %p108 = por %p106, %p107
      %p109 = scmp.ne.s32.totalorder %s97, %s98
      %p110 = scmp.eq.s32.totalorder %s25, 1
      %p111 = por %p109, %p110
      %p113 = scmp.ne.s32.totalorder %s98, %s112
      %p114 = scmp.eq.s32.totalorder %s25, 0
      %p115 = por %p113, %p114
      %s117 = sadd.s32 %s116, 1
      %p120 = scmp.eq.s32.totalorder %s19, 1
      %p121 = scmp.ne.s32.totalorder %s116, %s118
      %p122 = scmp.eq.s32.totalorder %s19, 0
      %p123 = por %p121, %p122
      %p124 = scmp.ne.s32.totalorder %s116, %s118
      %p125 = scmp.eq.s32.totalorder %s24, 1
      %p126 = por %p124, %p125
      %p127 = scmp.ne.s32.totalorder %s118, %s119
      %p128 = scmp.eq.s32.totalorder %s24, 0
      %p129 = por %p127, %p128
      %p130 = scmp.ne.s32.totalorder %s118, %s119
      %p131 = scmp.eq.s32.totalorder %s25, 1
      %p132 = por %p130, %p131
      %p134 = scmp.ne.s32.totalorder %s119, %s133
      %p135 = scmp.eq.s32.totalorder %s25, 0
      %p136 = por %p134, %p135
      %s138 = sadd.s32 %s137, 1
      %p141 = scmp.eq.s32.totalorder %s19, 1
      %p142 = scmp.ne.s32.totalorder %s137, %s139
      %p143 = scmp.eq.s32.totalorder %s19, 0
      %p144 = por %p142, %p143
      %p145 = scmp.ne.s32.totalorder %s137, %s139
      %p146 = scmp.eq.s32.totalorder %s24, 1
      %p147 = por %p145, %p146
      %p148 = scmp.ne.s32.totalorder %s139, %s140
      %p149 = scmp.eq.s32.totalorder %s24, 0
      %p150 = por %p148, %p149
      %p151 = scmp.ne.s32.totalorder %s139, %s140
      %p152 = scmp.eq.s32.totalorder %s25, 1
      %p153 = por %p151, %p152
      %p155 = scmp.ne.s32.totalorder %s140, %s154
      %p156 = scmp.eq.s32.totalorder %s25, 0
      %p157 = por %p155, %p156
      %s159 = sadd.s32 %s158, 1
      %p162 = scmp.eq.s32.totalorder %s19, 1
      %p163 = scmp.ne.s32.totalorder %s158, %s160
      %p164 = scmp.eq.s32.totalorder %s19, 0
      %p165 = por %p163, %p164
      %p166 = scmp.ne.s32.totalorder %s158, %s160
      %p167 = scmp.eq.s32.totalorder %s24, 1
      %p168 = por %p166, %p167
      %p169 = scmp.ne.s32.totalorder %s160, %s161
      %p170 = scmp.eq.s32.totalorder %s24, 0
      %p171 = por %p169, %p170
      %p172 = scmp.ne.s32.totalorder %s160, %s161
      %p173 = scmp.eq.s32.totalorder %s25, 1
      %p174 = por %p172, %p173
      %p176 = scmp.ne.s32.totalorder %s161, %s175
      %p177 = scmp.eq.s32.totalorder %s25, 0
      %p178 = por %p176, %p177
      %s179 = ssub.s32 %s19, %s26
      %p180 = scmp.eq.s32.totalorder %s179, 0
      %s182 = sadd.s32 %s181, 1
      %s183 = scalar_select %p180, %s181, %s182
      %p186 = pneg %p180
      %p187 = scmp.eq.s32.totalorder %s19, 1
      %p188 = por %p186, %p187
      %p189 = scmp.ne.s32.totalorder %s181, %s184
      %p190 = scmp.eq.s32.totalorder %s19, 0
      %p191 = por %p189, %p190
      %p192 = scmp.ne.s32.totalorder %s181, %s184
      %p193 = scmp.eq.s32.totalorder %s24, 1
      %p194 = por %p192, %p193
      %p195 = scmp.ne.s32.totalorder %s184, %s185
      %p196 = scmp.eq.s32.totalorder %s24, 0
      %p197 = por %p195, %p196
      %p198 = scmp.ne.s32.totalorder %s184, %s185
      %p199 = scmp.eq.s32.totalorder %s25, 1
      %p200 = por %p198, %p199
      %p202 = scmp.ne.s32.totalorder %s185, %s201
      %p203 = scmp.eq.s32.totalorder %s25, 0
      %p204 = por %p202, %p203
      %p205 = scmp.le.s32.totalorder 1, %s19
      %p206 = scmp.lt.s32.totalorder %s19, 3
      %p207 = pnand %p205, %p206
      %p208 = pneg %p207
      // Predicated region
      $region9: #{tpu_custom_call.1} parent=5 // pred_check
        _
      $region10: #{tpu_custom_call.1} parent=5 // pred_check_branch
        %210 = sbr.rel (%p207) target = $region12
      $region11: #{tpu_custom_call.1} parent=5 // pred_region
        %s211 = ssub.s32 %s19, 1
        // Predicated region
        $region13: #{tpu_custom_call.1} parent=11 // pred_check
          %p212 = pneg %p66
        $region14: #{tpu_custom_call.1} parent=11 // pred_check_branch
          %214 = sbr.rel (%p212) target = $region16
        $region15: #{tpu_custom_call.1} parent=11 // pred_region
          _
        $region16: #{tpu_custom_call.1} parent=11 // pred_fallthru
          _
        // Predicated region
        $region17: #{tpu_custom_call.1} parent=11 // pred_check
          %p215 = pneg %p87
        $region18: #{tpu_custom_call.1} parent=11 // pred_check_branch
          %217 = sbr.rel (%p215) target = $region20
        $region19: #{tpu_custom_call.1} parent=11 // pred_region
          _
        $region20: #{tpu_custom_call.1} parent=11 // pred_fallthru
          _
        // Predicated region
        $region21: #{tpu_custom_call.1} parent=11 // pred_check
          %p218 = pneg %p108
        $region22: #{tpu_custom_call.1} parent=11 // pred_check_branch
          %220 = sbr.rel (%p218) target = $region24
        $region23: #{tpu_custom_call.1} parent=11 // pred_region
          _
        $region24: #{tpu_custom_call.1} parent=11 // pred_fallthru
          _
        // Predicated region
        $region25: #{tpu_custom_call.1} parent=11 // pred_check
          %p221 = pneg %p129
        $region26: #{tpu_custom_call.1} parent=11 // pred_check_branch
          %223 = sbr.rel (%p221) target = $region28
        $region27: #{tpu_custom_call.1} parent=11 // pred_region
          _
        $region28: #{tpu_custom_call.1} parent=11 // pred_fallthru
          _
        // Predicated region
        $region29: #{tpu_custom_call.1} parent=11 // pred_check
          %p224 = pneg %p150
        $region30: #{tpu_custom_call.1} parent=11 // pred_check_branch
          %226 = sbr.rel (%p224) target = $region32
        $region31: #{tpu_custom_call.1} parent=11 // pred_region
          _
        $region32: #{tpu_custom_call.1} parent=11 // pred_fallthru
          _
        // Predicated region
        $region33: #{tpu_custom_call.1} parent=11 // pred_check
          %p227 = pneg %p171
        $region34: #{tpu_custom_call.1} parent=11 // pred_check_branch
          %229 = sbr.rel (%p227) target = $region36
        $region35: #{tpu_custom_call.1} parent=11 // pred_region
          _
        $region36: #{tpu_custom_call.1} parent=11 // pred_fallthru
          _
      $region12: #{tpu_custom_call.1} parent=5 // pred_fallthru
        _
      %p230 = scmp.lt.s32.totalorder %s19, 2
      // Predicated region
      $region37: #{tpu_custom_call.1} parent=5 // pred_check
        %p231 = pneg %p230
      $region38: #{tpu_custom_call.1} parent=5 // pred_check_branch
        %233 = sbr.rel (%p231) target = $region40
      $region39: #{tpu_custom_call.1} parent=5 // pred_region
        // Predicated region
        $region41: #{tpu_custom_call.1} parent=39 // pred_check
          %p234 = pneg %p39
        $region42: #{tpu_custom_call.1} parent=39 // pred_check_branch
          %236 = sbr.rel (%p234) target = $region44
        $region43: #{tpu_custom_call.1} parent=39 // pred_region
          %s237 = sand.u32 %s29, 1
          %s238 = scalar_lea.sflag [#allocation3], %s237
          %s239 = sand.u32 %s29, 1
          %s240 = smul.addr %s239, 128
          %s241 = scalar_lea.vmem [#allocation2], %s240
          %s242 = smul.u32 8, %s19
          %s244 = ssub.s32 2048, 2048
          %245 = vsyncadd %s238, %s244
          %s246 = smul.addr %s242, 2
          %s247 = smul.addr %s246, 128
          %s248 = scalar_lea.hbm %s0, %s247
          %s249 = sshll.u32 %s241, 4
          %s250 = int_to_ptr.vmem [resolvable:$true] %s249
          %255 = dma.hbm_to_vmem [thread:$0]  %s248, 2048, %s250, %s238, 128, 128, 8
        $region44: #{tpu_custom_call.1} parent=39 // pred_fallthru
          _
      $region40: #{tpu_custom_call.1} parent=5 // pred_fallthru
        _
      %p256 = scmp.le.s32.totalorder 1, %s19
      %p257 = scmp.lt.s32.totalorder %s19, 3
      %p258 = pnand %p256, %p257
      %p259 = pneg %p258
      // Predicated region
      $region45: #{tpu_custom_call.1} parent=5 // pred_check
        _
      $region46: #{tpu_custom_call.1} parent=5 // pred_check_branch
        %261 = sbr.rel (%p258) target = $region48
      $region47: #{tpu_custom_call.1} parent=5 // pred_region
        %s262 = ssub.s32 %s19, 1
        %s263 = sand.u32 %s32, 1
        %s264 = scalar_lea.sflag [#allocation3], %s263
        %s265 = sand.u32 %s32, 1
        %s266 = smul.addr %s265, 128
        %s267 = scalar_lea.vmem [#allocation2], %s266
        // Predicated region
        $region49: #{tpu_custom_call.1} parent=47 // pred_check
          %p268 = pneg %p45
        $region50: #{tpu_custom_call.1} parent=47 // pred_check_branch
          %270 = sbr.rel (%p268) target = $region52
        $region51: #{tpu_custom_call.1} parent=47 // pred_region
          %271 = dma.done %s264, 2048
        $region52: #{tpu_custom_call.1} parent=47 // pred_fallthru
          _
        %s272 = sand.u32 %s32, 1
        %s273 = scalar_lea.sflag [#allocation3], %s272
        %s274 = sand.u32 %s32, 1
        %s275 = smul.addr %s274, 128
        %s276 = scalar_lea.vmem [#allocation2], %s275
        %p277 = pneg %p45
        %p278 = pneg %p42
        %p279 = pneg %p66
        %p280 = pneg %p63
        %p281 = pneg %p87
        %p282 = pneg %p84
        %p283 = pneg %p108
        %p284 = pneg %p105
        %p285 = pneg %p129
        %p286 = pneg %p126
        %p287 = pneg %p150
        %p288 = pneg %p147
        %p289 = pneg %p171
        %p290 = pneg %p168
        %p291 = pneg %p197
        %p292 = pneg %p194
        %s293 = sand.u32 %s184, 1
        %s294 = scalar_lea.sflag [#allocation4], %s293
        %s295 = sand.u32 %s184, 1
        %s296 = smul.addr %s295, 128
        %s297 = scalar_lea.vmem [#allocation5], %s296
        %s298 = smul.u32 8, %s24
        %s299 = smul.u32 8, %s24
        %v301 = vld [vmem:[%s267] sm:$0xff]
        %v302 = vld [vmem:[%s267 + $0x8] sm:$0xff]
        %v303 = vld [vmem:[%s267 + $0x10] sm:$0xff]
        %v304 = vld [vmem:[%s267 + $0x18] sm:$0xff]
        %v305 = vld [vmem:[%s267 + $0x20] sm:$0xff]
        %v306 = vld [vmem:[%s267 + $0x28] sm:$0xff]
        %v307 = vld [vmem:[%s267 + $0x30] sm:$0xff]
        %v308 = vld [vmem:[%s267 + $0x38] sm:$0xff]
        %v309 = vld [vmem:[%s267 + $0x40] sm:$0xff]
        %v310 = vld [vmem:[%s267 + $0x48] sm:$0xff]
        %v311 = vld [vmem:[%s267 + $0x50] sm:$0xff]
        %v312 = vld [vmem:[%s267 + $0x58] sm:$0xff]
        %v313 = vld [vmem:[%s267 + $0x60] sm:$0xff]
        %v314 = vld [vmem:[%s267 + $0x68] sm:$0xff]
        %v315 = vld [vmem:[%s267 + $0x70] sm:$0xff]
        %v316 = vld [vmem:[%s267 + $0x78] sm:$0xff]
        %vm333 = vcmask 1043456
        %v334 = vrot.slane %v301, 4
        %v335 = vrot.slane %v302, 4
        %v336 = vsel %vm333, %v334, %v335
        %v337 = vrot.slane %v303, 4
        %v338 = vrot.slane %v304, 4
        %v339 = vsel %vm333, %v337, %v338
        %v340 = vrot.slane %v305, 4
        %v341 = vrot.slane %v306, 4
        %v342 = vsel %vm333, %v340, %v341
        %v343 = vrot.slane %v307, 4
        %v344 = vrot.slane %v308, 4
        %v345 = vsel %vm333, %v343, %v344
        %v346 = vrot.slane %v309, 4
        %v347 = vrot.slane %v310, 4
        %v348 = vsel %vm333, %v346, %v347
        %v349 = vrot.slane %v311, 4
        %v350 = vrot.slane %v312, 4
        %v351 = vsel %vm333, %v349, %v350
        %v352 = vrot.slane %v313, 4
        %v353 = vrot.slane %v314, 4
        %v354 = vsel %vm333, %v352, %v353
        %v355 = vrot.slane %v315, 4
        %v356 = vrot.slane %v316, 4
        %v357 = vsel %vm333, %v355, %v356
        %v374 = vsel %vm333, 0.0, %v334
        %v375 = vsel %vm333, 0.0, %v337
        %v376 = vsel %vm333, 0.0, %v340
        %v377 = vsel %vm333, 0.0, %v343
        %v378 = vsel %vm333, 0.0, %v346
        %v379 = vsel %vm333, 0.0, %v349
        %v380 = vsel %vm333, 0.0, %v352
        %v381 = vsel %vm333, 0.0, %v355
        %vm390 = vcmask 1045504
        %v391 = vrot.slane %v374, 2
        %v392 = vrot.slane %v336, 2
        %v393 = vsel %vm390, %v391, %v392
        %v394 = vrot.slane %v335, 2
        %v395 = vsel %vm390, %v392, %v394
        %v396 = vrot.slane %v375, 2
        %v397 = vrot.slane %v339, 2
        %v398 = vsel %vm390, %v396, %v397
        %v399 = vrot.slane %v338, 2
        %v400 = vsel %vm390, %v397, %v399
        %v401 = vrot.slane %v376, 2
        %v402 = vrot.slane %v342, 2
        %v403 = vsel %vm390, %v401, %v402
        %v404 = vrot.slane %v341, 2
        %v405 = vsel %vm390, %v402, %v404
        %v406 = vrot.slane %v377, 2
        %v407 = vrot.slane %v345, 2
        %v408 = vsel %vm390, %v406, %v407
        %v409 = vrot.slane %v344, 2
        %v410 = vsel %vm390, %v407, %v409
        %v411 = vrot.slane %v378, 2
        %v412 = vrot.slane %v348, 2
        %v413 = vsel %vm390, %v411, %v412
        %v414 = vrot.slane %v347, 2
        %v415 = vsel %vm390, %v412, %v414
        %v416 = vrot.slane %v379, 2
        %v417 = vrot.slane %v351, 2
        %v418 = vsel %vm390, %v416, %v417
        %v419 = vrot.slane %v350, 2
        %v420 = vsel %vm390, %v417, %v419
        %v421 = vrot.slane %v380, 2
        %v422 = vrot.slane %v354, 2
        %v423 = vsel %vm390, %v421, %v422
        %v424 = vrot.slane %v353, 2
        %v425 = vsel %vm390, %v422, %v424
        %v426 = vrot.slane %v381, 2
        %v427 = vrot.slane %v357, 2
        %v428 = vsel %vm390, %v426, %v427
        %v429 = vrot.slane %v356, 2
        %v430 = vsel %vm390, %v427, %v429
        %431 = vrot.lane.b32.xlu0 %v393, 32
        %v432 = vpop.permute.xlu0 %431
        %433 = vrot.lane.b32.xlu0 %v395, 32
        %v434 = vpop.permute.xlu0 %433
        %435 = vrot.lane.b32.xlu0 %v398, 32
        %v436 = vpop.permute.xlu0 %435
        %437 = vrot.lane.b32.xlu0 %v400, 32
        %v438 = vpop.permute.xlu0 %437
        %439 = vrot.lane.b32.xlu0 %v403, 32
        %v440 = vpop.permute.xlu0 %439
        %441 = vrot.lane.b32.xlu0 %v405, 32
        %v442 = vpop.permute.xlu0 %441
        %443 = vrot.lane.b32.xlu0 %v408, 32
        %v444 = vpop.permute.xlu0 %443
        %445 = vrot.lane.b32.xlu0 %v410, 32
        %v446 = vpop.permute.xlu0 %445
        %447 = vrot.lane.b32.xlu0 %v413, 32
        %v448 = vpop.permute.xlu0 %447
        %449 = vrot.lane.b32.xlu0 %v415, 32
        %v450 = vpop.permute.xlu0 %449
        %451 = vrot.lane.b32.xlu0 %v418, 32
        %v452 = vpop.permute.xlu0 %451
        %453 = vrot.lane.b32.xlu0 %v420, 32
        %v454 = vpop.permute.xlu0 %453
        %455 = vrot.lane.b32.xlu0 %v423, 32
        %v456 = vpop.permute.xlu0 %455
        %457 = vrot.lane.b32.xlu0 %v425, 32
        %v458 = vpop.permute.xlu0 %457
        %459 = vrot.lane.b32.xlu0 %v428, 32
        %v460 = vpop.permute.xlu0 %459
        %461 = vrot.lane.b32.xlu0 %v430, 32
        %v462 = vpop.permute.xlu0 %461
        %v479 = vrot.slane %v374, 4
        %v480 = vrot.slane %v336, 4
        %v481 = vsel %vm333, %v479, %v480
        %v482 = vrot.slane %v335, 4
        %v483 = vsel %vm333, %v480, %v482
        %v484 = vrot.slane %v375, 4
        %v485 = vrot.slane %v339, 4
        %v486 = vsel %vm333, %v484, %v485
        %v487 = vrot.slane %v338, 4
        %v488 = vsel %vm333, %v485, %v487
        %v489 = vrot.slane %v376, 4
        %v490 = vrot.slane %v342, 4
        %v491 = vsel %vm333, %v489, %v490
        %v492 = vrot.slane %v341, 4
        %v493 = vsel %vm333, %v490, %v492
        %v494 = vrot.slane %v377, 4
        %v495 = vrot.slane %v345, 4
        %v496 = vsel %vm333, %v494, %v495
        %v497 = vrot.slane %v344, 4
        %v498 = vsel %vm333, %v495, %v497
        %v499 = vrot.slane %v378, 4
        %v500 = vrot.slane %v348, 4
        %v501 = vsel %vm333, %v499, %v500
        %v502 = vrot.slane %v347, 4
        %v503 = vsel %vm333, %v500, %v502
        %v504 = vrot.slane %v379, 4
        %v505 = vrot.slane %v351, 4
        %v506 = vsel %vm333, %v504, %v505
        %v507 = vrot.slane %v350, 4
        %v508 = vsel %vm333, %v505, %v507
        %v509 = vrot.slane %v380, 4
        %v510 = vrot.slane %v354, 4
        %v511 = vsel %vm333, %v509, %v510
        %v512 = vrot.slane %v353, 4
        %v513 = vsel %vm333, %v510, %v512
        %v514 = vrot.slane %v381, 4
        %v515 = vrot.slane %v357, 4
        %v516 = vsel %vm333, %v514, %v515
        %v517 = vrot.slane %v356, 4
        %v518 = vsel %vm333, %v515, %v517
        %519 = vrot.lane.b32.xlu0 %v481, 64
        %v520 = vpop.permute.xlu0 %519
        %521 = vrot.lane.b32.xlu0 %v483, 64
        %v522 = vpop.permute.xlu0 %521
        %523 = vrot.lane.b32.xlu0 %v486, 64
        %v524 = vpop.permute.xlu0 %523
        %525 = vrot.lane.b32.xlu0 %v488, 64
        %v526 = vpop.permute.xlu0 %525
        %527 = vrot.lane.b32.xlu0 %v491, 64
        %v528 = vpop.permute.xlu0 %527
        %529 = vrot.lane.b32.xlu0 %v493, 64
        %v530 = vpop.permute.xlu0 %529
        %531 = vrot.lane.b32.xlu0 %v496, 64
        %v532 = vpop.permute.xlu0 %531
        %533 = vrot.lane.b32.xlu0 %v498, 64
        %v534 = vpop.permute.xlu0 %533
        %535 = vrot.lane.b32.xlu0 %v501, 64
        %v536 = vpop.permute.xlu0 %535
        %537 = vrot.lane.b32.xlu0 %v503, 64
        %v538 = vpop.permute.xlu0 %537
        %539 = vrot.lane.b32.xlu0 %v506, 64
        %v540 = vpop.permute.xlu0 %539
        %541 = vrot.lane.b32.xlu0 %v508, 64
        %v542 = vpop.permute.xlu0 %541
        %543 = vrot.lane.b32.xlu0 %v511, 64
        %v544 = vpop.permute.xlu0 %543
        %545 = vrot.lane.b32.xlu0 %v513, 64
        %v546 = vpop.permute.xlu0 %545
        %547 = vrot.lane.b32.xlu0 %v516, 64
        %v548 = vpop.permute.xlu0 %547
        %549 = vrot.lane.b32.xlu0 %v518, 64
        %v550 = vpop.permute.xlu0 %549
        %vm567 = vcmask 261120
        %v568 = vsel %vm567, %v374, %v432
        %v569 = vsel %vm567, %v336, %v434
        %v570 = vsel %vm567, %v375, %v436
        %v571 = vsel %vm567, %v339, %v438
        %v572 = vsel %vm567, %v376, %v440
        %v573 = vsel %vm567, %v342, %v442
        %v574 = vsel %vm567, %v377, %v444
        %v575 = vsel %vm567, %v345, %v446
        %v576 = vsel %vm567, %v378, %v448
        %v577 = vsel %vm567, %v348, %v450
        %v578 = vsel %vm567, %v379, %v452
        %v579 = vsel %vm567, %v351, %v454
        %v580 = vsel %vm567, %v380, %v456
        %v581 = vsel %vm567, %v354, %v458
        %v582 = vsel %vm567, %v381, %v460
        %v583 = vsel %vm567, %v357, %v462
        %vm584 = vcmask 523264
        %v585 = vsel %vm584, %v568, %v520
        %v586 = vsel %vm584, %v569, %v522
        %v587 = vsel %vm584, %v570, %v524
        %v588 = vsel %vm584, %v571, %v526
        %v589 = vsel %vm584, %v572, %v528
        %v590 = vsel %vm584, %v573, %v530
        %v591 = vsel %vm584, %v574, %v532
        %v592 = vsel %vm584, %v575, %v534
        %v593 = vsel %vm584, %v576, %v536
        %v594 = vsel %vm584, %v577, %v538
        %v595 = vsel %vm584, %v578, %v540
        %v596 = vsel %vm584, %v579, %v542
        %v597 = vsel %vm584, %v580, %v544
        %v598 = vsel %vm584, %v581, %v546
        %v599 = vsel %vm584, %v582, %v548
        %v600 = vsel %vm584, %v583, %v550
        %v601 = vpack.c.bf16 %v586, %v585
        %v602 = vpack.c.bf16 %v588, %v587
        %v603 = vpack.c.bf16 %v590, %v589
        %v604 = vpack.c.bf16 %v592, %v591
        %v605 = vpack.c.bf16 %v594, %v593
        %v606 = vpack.c.bf16 %v596, %v595
        %v607 = vpack.c.bf16 %v598, %v597
        %v608 = vpack.c.bf16 %v600, %v599
        %v609 = vld [vmem:[%s1] sm:$0xf]
        %v610 = vld [vmem:[%s1 + $0x4] sm:$0xf]
        %v611 = vld [vmem:[%s1 + $0x8] sm:$0xf]
        %v612 = vld [vmem:[%s1 + $0xc] sm:$0xf]
        %v613 = vld [vmem:[%s1 + $0x10] sm:$0xf]
        %v614 = vld [vmem:[%s1 + $0x14] sm:$0xf]
        %v615 = vld [vmem:[%s1 + $0x18] sm:$0xf]
        %v616 = vld [vmem:[%s1 + $0x1c] sm:$0xf]
        %v617 = vld [vmem:[%s1 + $0x20] sm:$0xf]
        %v618 = vld [vmem:[%s1 + $0x24] sm:$0xf]
        %v619 = vld [vmem:[%s1 + $0x28] sm:$0xf]
        %v620 = vld [vmem:[%s1 + $0x2c] sm:$0xf]
        %v621 = vld [vmem:[%s2] sm:$0x1]
        %v623 = vlaneseq
        %v624 = vshrl.u32 %v623, 7
        %v625 = vsub.s32 0, %v624
        %v626 = vrot.slane %v621, %v625
        %v640 = vunpack.c.l.b16 %v609
        %v641 = vunpack.c.l.b16 %v610
        %v642 = vunpack.c.l.b16 %v611
        %v643 = vunpack.c.l.b16 %v612
        %v644 = vunpack.c.l.b16 %v613
        %v645 = vunpack.c.l.b16 %v614
        %v646 = vunpack.c.l.b16 %v615
        %v647 = vunpack.c.l.b16 %v616
        %v648 = vunpack.c.l.b16 %v617
        %v649 = vunpack.c.l.b16 %v618
        %v650 = vunpack.c.l.b16 %v619
        %v651 = vunpack.c.l.b16 %v620
        %v652 = vpack.c.b16 %v641, %v640
        %v653 = vpack.c.b16 %v643, %v642
        %v654 = vpack.c.b16 %v645, %v644
        %v655 = vpack.c.b16 %v647, %v646
        %v656 = vpack.c.b16 %v649, %v648
        %v657 = vpack.c.b16 %v651, %v650
        %vm664 = vcmask 785408
        %v666 = vsel %vm664, %v601, 0
        %v669 = vsel %vm664, %v602, 0
        %v672 = vsel %vm664, %v603, 0
        %v675 = vsel %vm664, %v604, 0
        %v678 = vsel %vm664, %v605, 0
        %v681 = vsel %vm664, %v606, 0
        %v684 = vsel %vm664, %v607, 0
        %v687 = vsel %vm664, %v608, 0
        %689 = vmatprep.subr.bf16.mxu0 0
        %690 = vmatpush1.bf16.msra.mxu0 %v652
        %691 = vmatprep.subr.bf16.mxu0 0
        %692 = vmatpush1.bf16.msra.mxu0 %v653
        %693 = vmatprep.subr.bf16.mxu0 0
        %694 = vmatpush1.bf16.msra.mxu0 %v654
        %695 = vmatprep.subr.bf16.mxu0 0
        %696 = vmatpush1.bf16.msra.mxu0 %v655
        %697 = vmatprep.subr.bf16.mxu0 0
        %698 = vmatpush1.bf16.msra.mxu0 %v656
        %699 = vmatprep.subr.bf16.mxu0 0
        %700 = vmatpush1.bf16.msra.mxu0 %v657
        %701 = vmatprep.subr.bf16.mxu0 0
        %702 = vmatpush1.bf16.msra.mxu0 0
        %703 = vmatprep.subr.bf16.mxu0 0
        %704 = vmatpush1.bf16.msra.mxu0 0
        %705 = vmatprep.subr.bf16.mxu0 0
        %706 = vmatpush1.bf16.msra.mxu0 0
        %707 = vmatprep.subr.bf16.mxu0 0
        %708 = vmatpush1.bf16.msra.mxu0 0
        %709 = vmatprep.subr.bf16.mxu0 0
        %710 = vmatpush1.bf16.msra.mxu0 0
        %711 = vmatprep.subr.bf16.mxu0 0
        %712 = vmatpush1.bf16.msra.mxu0 0
        %713 = vmatprep.subr.bf16.mxu0 0
        %714 = vmatpush1.bf16.msra.mxu0 0
        %715 = vmatprep.subr.bf16.mxu0 0
        %716 = vmatpush1.bf16.msra.mxu0 0
        %717 = vmatprep.subr.bf16.mxu0 0
        %718 = vmatpush1.bf16.msra.mxu0 0
        %719 = vmatprep.subr.bf16.mxu0 0
        %720 = vmatpush1.bf16.msra.mxu0 0
        %721 = vmatprep.mubr.bf16.mxu0 0
        %722 = vmatmul.mubr.bf16.gmra.mrb[0].mxu0 %v666
        %v723 = vpop.f32.mrb[0].mxu0
        %v724 = vadd.f32 %v626, %v723
        %v725 = vpop.f32.mrb[0].mxu0
        %v726 = vpop.f32.mrb[0].mxu0
        %v727 = vadd.f32 %v626, %v726
        %v728 = vpop.f32.mrb[0].mxu0
        %729 = vmatprep.mubr.bf16.mxu0 0
        %730 = vmatmul.mubr.bf16.gmra.mrb[0].mxu0 %v669
        %v731 = vpop.f32.mrb[0].mxu0
        %v732 = vadd.f32 %v626, %v731
        %v733 = vpop.f32.mrb[0].mxu0
        %v734 = vpop.f32.mrb[0].mxu0
        %v735 = vadd.f32 %v626, %v734
        %v736 = vpop.f32.mrb[0].mxu0
        %737 = vmatprep.mubr.bf16.mxu0 0
        %738 = vmatmul.mubr.bf16.gmra.mrb[0].mxu0 %v672
        %v739 = vpop.f32.mrb[0].mxu0
        %v740 = vadd.f32 %v626, %v739
        %v741 = vpop.f32.mrb[0].mxu0
        %v742 = vpop.f32.mrb[0].mxu0
        %v743 = vadd.f32 %v626, %v742
        %v744 = vpop.f32.mrb[0].mxu0
        %745 = vmatprep.mubr.bf16.mxu0 0
        %746 = vmatmul.mubr.bf16.gmra.mrb[0].mxu0 %v675
        %v747 = vpop.f32.mrb[0].mxu0
        %v748 = vadd.f32 %v626, %v747
        %v749 = vpop.f32.mrb[0].mxu0
        %v750 = vpop.f32.mrb[0].mxu0
        %v751 = vadd.f32 %v626, %v750
        %v752 = vpop.f32.mrb[0].mxu0
        %753 = vmatprep.mubr.bf16.mxu0 0
        %754 = vmatmul.mubr.bf16.gmra.mrb[0].mxu0 %v678
        %v755 = vpop.f32.mrb[0].mxu0
        %v756 = vadd.f32 %v626, %v755
        %v757 = vpop.f32.mrb[0].mxu0
        %v758 = vpop.f32.mrb[0].mxu0
        %v759 = vadd.f32 %v626, %v758
        %v760 = vpop.f32.mrb[0].mxu0
        %761 = vmatprep.mubr.bf16.mxu0 0
        %762 = vmatmul.mubr.bf16.gmra.mrb[0].mxu0 %v681
        %v763 = vpop.f32.mrb[0].mxu0
        %v764 = vadd.f32 %v626, %v763
        %v765 = vpop.f32.mrb[0].mxu0
        %v766 = vpop.f32.mrb[0].mxu0
        %v767 = vadd.f32 %v626, %v766
        %v768 = vpop.f32.mrb[0].mxu0
        %769 = vmatprep.mubr.bf16.mxu0 0
        %770 = vmatmul.mubr.bf16.gmra.mrb[0].mxu0 %v684
        %v771 = vpop.f32.mrb[0].mxu0
        %v772 = vadd.f32 %v626, %v771
        %v773 = vpop.f32.mrb[0].mxu0
        %v774 = vpop.f32.mrb[0].mxu0
        %v775 = vadd.f32 %v626, %v774
        %v776 = vpop.f32.mrb[0].mxu0
        %777 = vmatprep.mubr.bf16.mxu0 0
        %778 = vmatmul.mubr.bf16.gmra.mrb[0].mxu0 %v687
        %v779 = vpop.f32.mrb[0].mxu0
        %v780 = vadd.f32 %v626, %v779
        %v781 = vpop.f32.mrb[0].mxu0
        %v782 = vpop.f32.mrb[0].mxu0
        %v783 = vadd.f32 %v626, %v782
        %v784 = vpop.f32.mrb[0].mxu0
        %785 = vdwg.mxu0
        %v786 = vmax.f32 %v724, 0.0
        %v787 = vmax.f32 %v727, 0.0
        %v788 = vmax.f32 %v732, 0.0
        %v789 = vmax.f32 %v735, 0.0
        %v790 = vmax.f32 %v740, 0.0
        %v791 = vmax.f32 %v743, 0.0
        %v792 = vmax.f32 %v748, 0.0
        %v793 = vmax.f32 %v751, 0.0
        %v794 = vmax.f32 %v756, 0.0
        %v795 = vmax.f32 %v759, 0.0
        %v796 = vmax.f32 %v764, 0.0
        %v797 = vmax.f32 %v767, 0.0
        %v798 = vmax.f32 %v772, 0.0
        %v799 = vmax.f32 %v775, 0.0
        %v800 = vmax.f32 %v780, 0.0
        %v801 = vmax.f32 %v783, 0.0
        %v818 = vrot.slane %v786, 4
        %v819 = vrot.slane %v787, 4
        %v820 = vsel %vm333, %v818, %v819
        %v821 = vrot.slane %v788, 4
        %v822 = vrot.slane %v789, 4
        %v823 = vsel %vm333, %v821, %v822
        %v824 = vrot.slane %v790, 4
        %v825 = vrot.slane %v791, 4
        %v826 = vsel %vm333, %v824, %v825
        %v827 = vrot.slane %v792, 4
        %v828 = vrot.slane %v793, 4
        %v829 = vsel %vm333, %v827, %v828
        %v830 = vrot.slane %v794, 4
        %v831 = vrot.slane %v795, 4
        %v832 = vsel %vm333, %v830, %v831
        %v833 = vrot.slane %v796, 4
        %v834 = vrot.slane %v797, 4
        %v835 = vsel %vm333, %v833, %v834
        %v836 = vrot.slane %v798, 4
        %v837 = vrot.slane %v799, 4
        %v838 = vsel %vm333, %v836, %v837
        %v839 = vrot.slane %v800, 4
        %v840 = vrot.slane %v801, 4
        %v841 = vsel %vm333, %v839, %v840
        %v858 = vsel %vm333, 0.0, %v818
        %v859 = vsel %vm333, 0.0, %v821
        %v860 = vsel %vm333, 0.0, %v824
        %v861 = vsel %vm333, 0.0, %v827
        %v862 = vsel %vm333, 0.0, %v830
        %v863 = vsel %vm333, 0.0, %v833
        %v864 = vsel %vm333, 0.0, %v836
        %v865 = vsel %vm333, 0.0, %v839
        %v874 = vrot.slane %v858, 2
        %v875 = vrot.slane %v820, 2
        %v876 = vsel %vm390, %v874, %v875
        %v877 = vrot.slane %v819, 2
        %v878 = vsel %vm390, %v875, %v877
        %v879 = vrot.slane %v859, 2
        %v880 = vrot.slane %v823, 2
        %v881 = vsel %vm390, %v879, %v880
        %v882 = vrot.slane %v822, 2
        %v883 = vsel %vm390, %v880, %v882
        %v884 = vrot.slane %v860, 2
        %v885 = vrot.slane %v826, 2
        %v886 = vsel %vm390, %v884, %v885
        %v887 = vrot.slane %v825, 2
        %v888 = vsel %vm390, %v885, %v887
        %v889 = vrot.slane %v861, 2
        %v890 = vrot.slane %v829, 2
        %v891 = vsel %vm390, %v889, %v890
        %v892 = vrot.slane %v828, 2
        %v893 = vsel %vm390, %v890, %v892
        %v894 = vrot.slane %v862, 2
        %v895 = vrot.slane %v832, 2
        %v896 = vsel %vm390, %v894, %v895
        %v897 = vrot.slane %v831, 2
        %v898 = vsel %vm390, %v895, %v897
        %v899 = vrot.slane %v863, 2
        %v900 = vrot.slane %v835, 2
        %v901 = vsel %vm390, %v899, %v900
        %v902 = vrot.slane %v834, 2
        %v903 = vsel %vm390, %v900, %v902
        %v904 = vrot.slane %v864, 2
        %v905 = vrot.slane %v838, 2
        %v906 = vsel %vm390, %v904, %v905
        %v907 = vrot.slane %v837, 2
        %v908 = vsel %vm390, %v905, %v907
        %v909 = vrot.slane %v865, 2
        %v910 = vrot.slane %v841, 2
        %v911 = vsel %vm390, %v909, %v910
        %v912 = vrot.slane %v840, 2
        %v913 = vsel %vm390, %v910, %v912
        %914 = vrot.lane.b32.xlu0 %v876, 64
        %v915 = vpop.permute.xlu0 %914
        %916 = vrot.lane.b32.xlu0 %v878, 64
        %v917 = vpop.permute.xlu0 %916
        %918 = vrot.lane.b32.xlu0 %v881, 64
        %v919 = vpop.permute.xlu0 %918
        %920 = vrot.lane.b32.xlu0 %v883, 64
        %v921 = vpop.permute.xlu0 %920
        %922 = vrot.lane.b32.xlu0 %v886, 64
        %v923 = vpop.permute.xlu0 %922
        %924 = vrot.lane.b32.xlu0 %v888, 64
        %v925 = vpop.permute.xlu0 %924
        %926 = vrot.lane.b32.xlu0 %v891, 64
        %v927 = vpop.permute.xlu0 %926
        %928 = vrot.lane.b32.xlu0 %v893, 64
        %v929 = vpop.permute.xlu0 %928
        %930 = vrot.lane.b32.xlu0 %v896, 64
        %v931 = vpop.permute.xlu0 %930
        %932 = vrot.lane.b32.xlu0 %v898, 64
        %v933 = vpop.permute.xlu0 %932
        %934 = vrot.lane.b32.xlu0 %v901, 64
        %v935 = vpop.permute.xlu0 %934
        %936 = vrot.lane.b32.xlu0 %v903, 64
        %v937 = vpop.permute.xlu0 %936
        %938 = vrot.lane.b32.xlu0 %v906, 64
        %v939 = vpop.permute.xlu0 %938
        %940 = vrot.lane.b32.xlu0 %v908, 64
        %v941 = vpop.permute.xlu0 %940
        %942 = vrot.lane.b32.xlu0 %v911, 64
        %v943 = vpop.permute.xlu0 %942
        %944 = vrot.lane.b32.xlu0 %v913, 64
        %v945 = vpop.permute.xlu0 %944
        %v962 = vrot.slane %v858, 4
        %v963 = vrot.slane %v820, 4
        %v964 = vsel %vm333, %v962, %v963
        %v965 = vrot.slane %v819, 4
        %v966 = vsel %vm333, %v963, %v965
        %v967 = vrot.slane %v859, 4
        %v968 = vrot.slane %v823, 4
        %v969 = vsel %vm333, %v967, %v968
        %v970 = vrot.slane %v822, 4
        %v971 = vsel %vm333, %v968, %v970
        %v972 = vrot.slane %v860, 4
        %v973 = vrot.slane %v826, 4
        %v974 = vsel %vm333, %v972, %v973
        %v975 = vrot.slane %v825, 4
        %v976 = vsel %vm333, %v973, %v975
        %v977 = vrot.slane %v861, 4
        %v978 = vrot.slane %v829, 4
        %v979 = vsel %vm333, %v977, %v978
        %v980 = vrot.slane %v828, 4
        %v981 = vsel %vm333, %v978, %v980
        %v982 = vrot.slane %v862, 4
        %v983 = vrot.slane %v832, 4
        %v984 = vsel %vm333, %v982, %v983
        %v985 = vrot.slane %v831, 4
        %v986 = vsel %vm333, %v983, %v985
        %v987 = vrot.slane %v863, 4
        %v988 = vrot.slane %v835, 4
        %v989 = vsel %vm333, %v987, %v988
        %v990 = vrot.slane %v834, 4
        %v991 = vsel %vm333, %v988, %v990
        %v992 = vrot.slane %v864, 4
        %v993 = vrot.slane %v838, 4
        %v994 = vsel %vm333, %v992, %v993
        %v995 = vrot.slane %v837, 4
        %v996 = vsel %vm333, %v993, %v995
        %v997 = vrot.slane %v865, 4
        %v998 = vrot.slane %v841, 4
        %v999 = vsel %vm333, %v997, %v998
        %v1000 = vrot.slane %v840, 4
        %v1001 = vsel %vm333, %v998, %v1000
        %v1018 = vsel %vm584, %v858, %v915
        %v1019 = vsel %vm584, %v820, %v917
        %v1020 = vsel %vm584, %v859, %v919
        %v1021 = vsel %vm584, %v823, %v921
        %v1022 = vsel %vm584, %v860, %v923
        %v1023 = vsel %vm584, %v826, %v925
        %v1024 = vsel %vm584, %v861, %v927
        %v1025 = vsel %vm584, %v829, %v929
        %v1026 = vsel %vm584, %v862, %v931
        %v1027 = vsel %vm584, %v832, %v933
        %v1028 = vsel %vm584, %v863, %v935
        %v1029 = vsel %vm584, %v835, %v937
        %v1030 = vsel %vm584, %v864, %v939
        %v1031 = vsel %vm584, %v838, %v941
        %v1032 = vsel %vm584, %v865, %v943
        %v1033 = vsel %vm584, %v841, %v945
        %v1034 = vpack.c.bf16 %v1019, %v1018
        %v1035 = vpack.c.bf16 %v966, %v964
        %v1036 = vpack.c.bf16 %v1021, %v1020
        %v1037 = vpack.c.bf16 %v971, %v969
        %v1038 = vpack.c.bf16 %v1023, %v1022
        %v1039 = vpack.c.bf16 %v976, %v974
        %v1040 = vpack.c.bf16 %v1025, %v1024
        %v1041 = vpack.c.bf16 %v981, %v979
        %v1042 = vpack.c.bf16 %v1027, %v1026
        %v1043 = vpack.c.bf16 %v986, %v984
        %v1044 = vpack.c.bf16 %v1029, %v1028
        %v1045 = vpack.c.bf16 %v991, %v989
        %v1046 = vpack.c.bf16 %v1031, %v1030
        %v1047 = vpack.c.bf16 %v996, %v994
        %v1048 = vpack.c.bf16 %v1033, %v1032
        %v1049 = vpack.c.bf16 %v1001, %v999
        %v1050 = vld [vmem:[%s3] sm:$0xf]
        %v1051 = vld [vmem:[%s3 + $0x4] sm:$0xf]
        %v1052 = vld [vmem:[%s3 + $0x8] sm:$0xf]
        %v1053 = vld [vmem:[%s3 + $0xc] sm:$0xf]
        %v1054 = vld [vmem:[%s3 + $0x10] sm:$0xf]
        %v1055 = vld [vmem:[%s3 + $0x14] sm:$0xf]
        %v1056 = vld [vmem:[%s3 + $0x18] sm:$0xf]
        %v1057 = vld [vmem:[%s3 + $0x1c] sm:$0xf]
        %v1058 = vld [vmem:[%s3 + $0x20] sm:$0xf]
        %v1059 = vld [vmem:[%s3 + $0x24] sm:$0xf]
        %v1060 = vld [vmem:[%s3 + $0x28] sm:$0xf]
        %v1061 = vld [vmem:[%s3 + $0x2c] sm:$0xf]
        %v1062 = vld [vmem:[%s3 + $0x30] sm:$0xf]
        %v1063 = vld [vmem:[%s3 + $0x34] sm:$0xf]
        %v1064 = vld [vmem:[%s3 + $0x38] sm:$0xf]
        %v1065 = vld [vmem:[%s3 + $0x3c] sm:$0xf]
        %v1066 = vld [vmem:[%s3 + $0x40] sm:$0xf]
        %v1067 = vld [vmem:[%s3 + $0x44] sm:$0xf]
        %v1068 = vld [vmem:[%s3 + $0x48] sm:$0xf]
        %v1069 = vld [vmem:[%s3 + $0x4c] sm:$0xf]
        %v1070 = vld [vmem:[%s3 + $0x50] sm:$0xf]
        %v1071 = vld [vmem:[%s3 + $0x54] sm:$0xf]
        %v1072 = vld [vmem:[%s3 + $0x58] sm:$0xf]
        %v1073 = vld [vmem:[%s3 + $0x5c] sm:$0xf]
        %v1074 = vld [vmem:[%s4] sm:$0x1]
        %v1076 = vlaneseq
        %v1077 = vshrl.u32 %v1076, 7
        %v1078 = vsub.s32 0, %v1077
        %v1079 = vrot.slane %v1074, %v1078
        %v1105 = vunpack.c.l.b16 %v1050
        %v1106 = vunpack.c.l.b16 %v1051
        %v1107 = vunpack.c.l.b16 %v1052
        %v1108 = vunpack.c.l.b16 %v1053
        %v1109 = vunpack.c.l.b16 %v1054
        %v1110 = vunpack.c.l.b16 %v1055
        %v1111 = vunpack.c.l.b16 %v1056
        %v1112 = vunpack.c.l.b16 %v1057
        %v1113 = vunpack.c.l.b16 %v1058
        %v1114 = vunpack.c.l.b16 %v1059
        %v1115 = vunpack.c.l.b16 %v1060
        %v1116 = vunpack.c.l.b16 %v1061
        %v1117 = vunpack.c.l.b16 %v1062
        %v1118 = vunpack.c.l.b16 %v1063
        %v1119 = vunpack.c.l.b16 %v1064
        %v1120 = vunpack.c.l.b16 %v1065
        %v1121 = vunpack.c.l.b16 %v1066
        %v1122 = vunpack.c.l.b16 %v1067
        %v1123 = vunpack.c.l.b16 %v1068
        %v1124 = vunpack.c.l.b16 %v1069
        %v1125 = vunpack.c.l.b16 %v1070
        %v1126 = vunpack.c.l.b16 %v1071
        %v1127 = vunpack.c.l.b16 %v1072
        %v1128 = vunpack.c.l.b16 %v1073
        %v1129 = vpack.c.b16 %v1106, %v1105
        %v1130 = vpack.c.b16 %v1108, %v1107
        %v1131 = vpack.c.b16 %v1110, %v1109
        %v1132 = vpack.c.b16 %v1112, %v1111
        %v1133 = vpack.c.b16 %v1114, %v1113
        %v1134 = vpack.c.b16 %v1116, %v1115
        %v1135 = vpack.c.b16 %v1118, %v1117
        %v1136 = vpack.c.b16 %v1120, %v1119
        %v1137 = vpack.c.b16 %v1122, %v1121
        %v1138 = vpack.c.b16 %v1124, %v1123
        %v1139 = vpack.c.b16 %v1126, %v1125
        %v1140 = vpack.c.b16 %v1128, %v1127
        %v1154 = vsel %vm584, %v1035, 0
        %v1157 = vsel %vm584, %v1037, 0
        %v1160 = vsel %vm584, %v1039, 0
        %v1163 = vsel %vm584, %v1041, 0
        %v1166 = vsel %vm584, %v1043, 0
        %v1169 = vsel %vm584, %v1045, 0
        %v1172 = vsel %vm584, %v1047, 0
        %v1175 = vsel %vm584, %v1049, 0
        %1177 = vmatprep.subr.bf16.mxu0 0
        %1178 = vmatpush1.bf16.msra.mxu0 %v1129
        %1179 = vmatprep.subr.bf16.mxu0 0
        %1180 = vmatpush1.bf16.msra.mxu0 %v1130
        %1181 = vmatprep.subr.bf16.mxu0 0
        %1182 = vmatpush1.bf16.msra.mxu0 %v1131
        %1183 = vmatprep.subr.bf16.mxu0 0
        %1184 = vmatpush1.bf16.msra.mxu0 %v1132
        %1185 = vmatprep.subr.bf16.mxu0 0
        %1186 = vmatpush1.bf16.msra.mxu0 %v1133
        %1187 = vmatprep.subr.bf16.mxu0 0
        %1188 = vmatpush1.bf16.msra.mxu0 %v1134
        %1189 = vmatprep.subr.bf16.mxu0 0
        %1190 = vmatpush1.bf16.msra.mxu0 %v1135
        %1191 = vmatprep.subr.bf16.mxu0 0
        %1192 = vmatpush1.bf16.msra.mxu0 %v1136
        %1193 = vmatprep.subr.bf16.mxu0 0
        %1194 = vmatpush1.bf16.msra.mxu0 %v1137
        %1195 = vmatprep.subr.bf16.mxu0 0
        %1196 = vmatpush1.bf16.msra.mxu0 %v1138
        %1197 = vmatprep.subr.bf16.mxu0 0
        %1198 = vmatpush1.bf16.msra.mxu0 %v1139
        %1199 = vmatprep.subr.bf16.mxu0 0
        %1200 = vmatpush1.bf16.msra.mxu0 %v1140
        %1201 = vmatprep.subr.bf16.mxu0 0
        %1202 = vmatpush1.bf16.msra.mxu0 0
        %1203 = vmatprep.subr.bf16.mxu0 0
        %1204 = vmatpush1.bf16.msra.mxu0 0
        %1205 = vmatprep.subr.bf16.mxu0 0
        %1206 = vmatpush1.bf16.msra.mxu0 0
        %1207 = vmatprep.subr.bf16.mxu0 0
        %1208 = vmatpush1.bf16.msra.mxu0 0
        %1209 = vmatprep.mubr.bf16.mxu0 %v1154
        %1210 = vmatmul.mubr.bf16.gmra.mrb[0].mxu0 %v1034
        %v1211 = vpop.f32.mrb[0].mxu0
        %v1212 = vadd.f32 %v1079, %v1211
        %v1213 = vpop.f32.mrb[0].mxu0
        %v1214 = vpop.f32.mrb[0].mxu0
        %v1215 = vadd.f32 %v1079, %v1214
        %v1216 = vpop.f32.mrb[0].mxu0
        %1217 = vmatprep.mubr.bf16.mxu0 %v1157
        %1218 = vmatmul.mubr.bf16.gmra.mrb[0].mxu0 %v1036
        %v1219 = vpop.f32.mrb[0].mxu0
        %v1220 = vadd.f32 %v1079, %v1219
        %v1221 = vpop.f32.mrb[0].mxu0
        %v1222 = vpop.f32.mrb[0].mxu0
        %v1223 = vadd.f32 %v1079, %v1222
        %v1224 = vpop.f32.mrb[0].mxu0
        %1225 = vmatprep.mubr.bf16.mxu0 %v1160
        %1226 = vmatmul.mubr.bf16.gmra.mrb[0].mxu0 %v1038
        %v1227 = vpop.f32.mrb[0].mxu0
        %v1228 = vadd.f32 %v1079, %v1227
        %v1229 = vpop.f32.mrb[0].mxu0
        %v1230 = vpop.f32.mrb[0].mxu0
        %v1231 = vadd.f32 %v1079, %v1230
        %v1232 = vpop.f32.mrb[0].mxu0
        %1233 = vmatprep.mubr.bf16.mxu0 %v1163
        %1234 = vmatmul.mubr.bf16.gmra.mrb[0].mxu0 %v1040
        %v1235 = vpop.f32.mrb[0].mxu0
        %v1236 = vadd.f32 %v1079, %v1235
        %v1237 = vpop.f32.mrb[0].mxu0
        %v1238 = vpop.f32.mrb[0].mxu0
        %v1239 = vadd.f32 %v1079, %v1238
        %v1240 = vpop.f32.mrb[0].mxu0
        %1241 = vmatprep.mubr.bf16.mxu0 %v1166
        %1242 = vmatmul.mubr.bf16.gmra.mrb[0].mxu0 %v1042
        %v1243 = vpop.f32.mrb[0].mxu0
        %v1244 = vadd.f32 %v1079, %v1243
        %v1245 = vpop.f32.mrb[0].mxu0
        %v1246 = vpop.f32.mrb[0].mxu0
        %v1247 = vadd.f32 %v1079, %v1246
        %v1248 = vpop.f32.mrb[0].mxu0
        %1249 = vmatprep.mubr.bf16.mxu0 %v1169
        %1250 = vmatmul.mubr.bf16.gmra.mrb[0].mxu0 %v1044
        %v1251 = vpop.f32.mrb[0].mxu0
        %v1252 = vadd.f32 %v1079, %v1251
        %v1253 = vpop.f32.mrb[0].mxu0
        %v1254 = vpop.f32.mrb[0].mxu0
        %v1255 = vadd.f32 %v1079, %v1254
        %v1256 = vpop.f32.mrb[0].mxu0
        %1257 = vmatprep.mubr.bf16.mxu0 %v1172
        %1258 = vmatmul.mubr.bf16.gmra.mrb[0].mxu0 %v1046
        %v1259 = vpop.f32.mrb[0].mxu0
        %v1260 = vadd.f32 %v1079, %v1259
        %v1261 = vpop.f32.mrb[0].mxu0
        %v1262 = vpop.f32.mrb[0].mxu0
        %v1263 = vadd.f32 %v1079, %v1262
        %v1264 = vpop.f32.mrb[0].mxu0
        %1265 = vmatprep.mubr.bf16.mxu0 %v1175
        %1266 = vmatmul.mubr.bf16.gmra.mrb[0].mxu0 %v1048
        %v1267 = vpop.f32.mrb[0].mxu0
        %v1268 = vadd.f32 %v1079, %v1267
        %v1269 = vpop.f32.mrb[0].mxu0
        %v1270 = vpop.f32.mrb[0].mxu0
        %v1271 = vadd.f32 %v1079, %v1270
        %v1272 = vpop.f32.mrb[0].mxu0
        %1273 = vdwg.mxu0
        %v1274 = vmax.f32 %v1212, 0.0
        %v1275 = vmax.f32 %v1215, 0.0
        %v1276 = vmax.f32 %v1220, 0.0
        %v1277 = vmax.f32 %v1223, 0.0
        %v1278 = vmax.f32 %v1228, 0.0
        %v1279 = vmax.f32 %v1231, 0.0
        %v1280 = vmax.f32 %v1236, 0.0
        %v1281 = vmax.f32 %v1239, 0.0
        %v1282 = vmax.f32 %v1244, 0.0
        %v1283 = vmax.f32 %v1247, 0.0
        %v1284 = vmax.f32 %v1252, 0.0
        %v1285 = vmax.f32 %v1255, 0.0
        %v1286 = vmax.f32 %v1260, 0.0
        %v1287 = vmax.f32 %v1263, 0.0
        %v1288 = vmax.f32 %v1268, 0.0
        %v1289 = vmax.f32 %v1271, 0.0
        %v1290 = vpack.c.bf16 %v302, %v301
        %v1291 = vpack.c.bf16 %v304, %v303
        %v1292 = vpack.c.bf16 %v306, %v305
        %v1293 = vpack.c.bf16 %v308, %v307
        %v1294 = vpack.c.bf16 %v310, %v309
        %v1295 = vpack.c.bf16 %v312, %v311
        %v1296 = vpack.c.bf16 %v314, %v313
        %v1297 = vpack.c.bf16 %v316, %v315
        %v1298 = vld [vmem:[%s5] sm:$0xf]
        %v1299 = vld [vmem:[%s5 + $0x4] sm:$0xf]
        %v1300 = vld [vmem:[%s5 + $0x8] sm:$0xf]
        %v1301 = vld [vmem:[%s5 + $0xc] sm:$0xf]
        %v1302 = vld [vmem:[%s6] sm:$0x1]
        %v1304 = vlaneseq
        %v1305 = vshrl.u32 %v1304, 7
        %v1306 = vsub.s32 0, %v1305
        %v1307 = vrot.slane %v1302, %v1306
        %v1313 = vunpack.c.l.b16 %v1298
        %v1314 = vunpack.c.l.b16 %v1299
        %v1315 = vunpack.c.l.b16 %v1300
        %v1316 = vunpack.c.l.b16 %v1301
        %v1317 = vpack.c.b16 %v1314, %v1313
        %v1318 = vpack.c.b16 %v1316, %v1315
        %v1322 = vsel %vm567, %v1290, 0
        %v1325 = vsel %vm567, %v1291, 0
        %v1328 = vsel %vm567, %v1292, 0
        %v1331 = vsel %vm567, %v1293, 0
        %v1334 = vsel %vm567, %v1294, 0
        %v1337 = vsel %vm567, %v1295, 0
        %v1340 = vsel %vm567, %v1296, 0
        %v1343 = vsel %vm567, %v1297, 0
        %1345 = vmatprep.subr.bf16.mxu0 0
        %1346 = vmatpush1.bf16.msra.mxu0 %v1317
        %1347 = vmatprep.subr.bf16.mxu0 0
        %1348 = vmatpush1.bf16.msra.mxu0 %v1318
        %1349 = vmatprep.subr.bf16.mxu0 0
        %1350 = vmatpush1.bf16.msra.mxu0 0
        %1351 = vmatprep.subr.bf16.mxu0 0
        %1352 = vmatpush1.bf16.msra.mxu0 0
        %1353 = vmatprep.subr.bf16.mxu0 0
        %1354 = vmatpush1.bf16.msra.mxu0 0
        %1355 = vmatprep.subr.bf16.mxu0 0
        %1356 = vmatpush1.bf16.msra.mxu0 0
        %1357 = vmatprep.subr.bf16.mxu0 0
        %1358 = vmatpush1.bf16.msra.mxu0 0
        %1359 = vmatprep.subr.bf16.mxu0 0
        %1360 = vmatpush1.bf16.msra.mxu0 0
        %1361 = vmatprep.subr.bf16.mxu0 0
        %1362 = vmatpush1.bf16.msra.mxu0 0
        %1363 = vmatprep.subr.bf16.mxu0 0
        %1364 = vmatpush1.bf16.msra.mxu0 0
        %1365 = vmatprep.subr.bf16.mxu0 0
        %1366 = vmatpush1.bf16.msra.mxu0 0
        %1367 = vmatprep.subr.bf16.mxu0 0
        %1368 = vmatpush1.bf16.msra.mxu0 0
        %1369 = vmatprep.subr.bf16.mxu0 0
        %1370 = vmatpush1.bf16.msra.mxu0 0
        %1371 = vmatprep.subr.bf16.mxu0 0
        %1372 = vmatpush1.bf16.msra.mxu0 0
        %1373 = vmatprep.subr.bf16.mxu0 0
        %1374 = vmatpush1.bf16.msra.mxu0 0
        %1375 = vmatprep.subr.bf16.mxu0 0
        %1376 = vmatpush1.bf16.msra.mxu0 0
        %1377 = vmatprep.mubr.bf16.mxu0 0
        %1378 = vmatmul.mubr.bf16.gmra.mrb[0].mxu0 %v1322
        %v1379 = vpop.f32.mrb[0].mxu0
        %v1380 = vadd.f32 %v1307, %v1379
        %v1381 = vpop.f32.mrb[0].mxu0
        %v1382 = vpop.f32.mrb[0].mxu0
        %v1383 = vadd.f32 %v1307, %v1382
        %v1384 = vpop.f32.mrb[0].mxu0
        %1385 = vmatprep.mubr.bf16.mxu0 0
        %1386 = vmatmul.mubr.bf16.gmra.mrb[0].mxu0 %v1325
        %v1387 = vpop.f32.mrb[0].mxu0
        %v1388 = vadd.f32 %v1307, %v1387
        %v1389 = vpop.f32.mrb[0].mxu0
        %v1390 = vpop.f32.mrb[0].mxu0
        %v1391 = vadd.f32 %v1307, %v1390
        %v1392 = vpop.f32.mrb[0].mxu0
        %1393 = vmatprep.mubr.bf16.mxu0 0
        %1394 = vmatmul.mubr.bf16.gmra.mrb[0].mxu0 %v1328
        %v1395 = vpop.f32.mrb[0].mxu0
        %v1396 = vadd.f32 %v1307, %v1395
        %v1397 = vpop.f32.mrb[0].mxu0
        %v1398 = vpop.f32.mrb[0].mxu0
        %v1399 = vadd.f32 %v1307, %v1398
        %v1400 = vpop.f32.mrb[0].mxu0
        %1401 = vmatprep.mubr.bf16.mxu0 0
        %1402 = vmatmul.mubr.bf16.gmra.mrb[0].mxu0 %v1331
        %v1403 = vpop.f32.mrb[0].mxu0
        %v1404 = vadd.f32 %v1307, %v1403
        %v1405 = vpop.f32.mrb[0].mxu0
        %v1406 = vpop.f32.mrb[0].mxu0
        %v1407 = vadd.f32 %v1307, %v1406
        %v1408 = vpop.f32.mrb[0].mxu0
        %1409 = vmatprep.mubr.bf16.mxu0 0
        %1410 = vmatmul.mubr.bf16.gmra.mrb[0].mxu0 %v1334
        %v1411 = vpop.f32.mrb[0].mxu0
        %v1412 = vadd.f32 %v1307, %v1411
        %v1413 = vpop.f32.mrb[0].mxu0
        %v1414 = vpop.f32.mrb[0].mxu0
        %v1415 = vadd.f32 %v1307, %v1414
        %v1416 = vpop.f32.mrb[0].mxu0
        %1417 = vmatprep.mubr.bf16.mxu0 0
        %1418 = vmatmul.mubr.bf16.gmra.mrb[0].mxu0 %v1337
        %v1419 = vpop.f32.mrb[0].mxu0
        %v1420 = vadd.f32 %v1307, %v1419
        %v1421 = vpop.f32.mrb[0].mxu0
        %v1422 = vpop.f32.mrb[0].mxu0
        %v1423 = vadd.f32 %v1307, %v1422
        %v1424 = vpop.f32.mrb[0].mxu0
        %1425 = vmatprep.mubr.bf16.mxu0 0
        %1426 = vmatmul.mubr.bf16.gmra.mrb[0].mxu0 %v1340
        %v1427 = vpop.f32.mrb[0].mxu0
        %v1428 = vadd.f32 %v1307, %v1427
        %v1429 = vpop.f32.mrb[0].mxu0
        %v1430 = vpop.f32.mrb[0].mxu0
        %v1431 = vadd.f32 %v1307, %v1430
        %v1432 = vpop.f32.mrb[0].mxu0
        %1433 = vmatprep.mubr.bf16.mxu0 0
        %1434 = vmatmul.mubr.bf16.gmra.mrb[0].mxu0 %v1343
        %v1435 = vpop.f32.mrb[0].mxu0
        %v1436 = vadd.f32 %v1307, %v1435
        %v1437 = vpop.f32.mrb[0].mxu0
        %v1438 = vpop.f32.mrb[0].mxu0
        %v1439 = vadd.f32 %v1307, %v1438
        %v1440 = vpop.f32.mrb[0].mxu0
        %1441 = vdwg.mxu0
        %v1442 = vadd.f32 %v1274, %v1380
        %v1443 = vadd.f32 %v1275, %v1383
        %v1444 = vadd.f32 %v1276, %v1388
        %v1445 = vadd.f32 %v1277, %v1391
        %v1446 = vadd.f32 %v1278, %v1396
        %v1447 = vadd.f32 %v1279, %v1399
        %v1448 = vadd.f32 %v1280, %v1404
        %v1449 = vadd.f32 %v1281, %v1407
        %v1450 = vadd.f32 %v1282, %v1412
        %v1451 = vadd.f32 %v1283, %v1415
        %v1452 = vadd.f32 %v1284, %v1420
        %v1453 = vadd.f32 %v1285, %v1423
        %v1454 = vadd.f32 %v1286, %v1428
        %v1455 = vadd.f32 %v1287, %v1431
        %v1456 = vadd.f32 %v1288, %v1436
        %v1457 = vadd.f32 %v1289, %v1439
        %v1458 = vmax.f32 %v1442, 0.0
        %v1459 = vmax.f32 %v1443, 0.0
        %v1460 = vmax.f32 %v1444, 0.0
        %v1461 = vmax.f32 %v1445, 0.0
        %v1462 = vmax.f32 %v1446, 0.0
        %v1463 = vmax.f32 %v1447, 0.0
        %v1464 = vmax.f32 %v1448, 0.0
        %v1465 = vmax.f32 %v1449, 0.0
        %v1466 = vmax.f32 %v1450, 0.0
        %v1467 = vmax.f32 %v1451, 0.0
        %v1468 = vmax.f32 %v1452, 0.0
        %v1469 = vmax.f32 %v1453, 0.0
        %v1470 = vmax.f32 %v1454, 0.0
        %v1471 = vmax.f32 %v1455, 0.0
        %v1472 = vmax.f32 %v1456, 0.0
        %v1473 = vmax.f32 %v1457, 0.0
        %1474 = vst.msk [vmem:[%s297] sm:$0xff] %vm584, %v1458
        %1475 = vst.msk [vmem:[%s297 + $0x8] sm:$0xff] %vm584, %v1459
        %1476 = vst.msk [vmem:[%s297 + $0x10] sm:$0xff] %vm584, %v1460
        %1477 = vst.msk [vmem:[%s297 + $0x18] sm:$0xff] %vm584, %v1461
        %1478 = vst.msk [vmem:[%s297 + $0x20] sm:$0xff] %vm584, %v1462
        %1479 = vst.msk [vmem:[%s297 + $0x28] sm:$0xff] %vm584, %v1463
        %1480 = vst.msk [vmem:[%s297 + $0x30] sm:$0xff] %vm584, %v1464
        %1481 = vst.msk [vmem:[%s297 + $0x38] sm:$0xff] %vm584, %v1465
        %1482 = vst.msk [vmem:[%s297 + $0x40] sm:$0xff] %vm584, %v1466
        %1483 = vst.msk [vmem:[%s297 + $0x48] sm:$0xff] %vm584, %v1467
        %1484 = vst.msk [vmem:[%s297 + $0x50] sm:$0xff] %vm584, %v1468
        %1485 = vst.msk [vmem:[%s297 + $0x58] sm:$0xff] %vm584, %v1469
        %1486 = vst.msk [vmem:[%s297 + $0x60] sm:$0xff] %vm584, %v1470
        %1487 = vst.msk [vmem:[%s297 + $0x68] sm:$0xff] %vm584, %v1471
        %1488 = vst.msk [vmem:[%s297 + $0x70] sm:$0xff] %vm584, %v1472
        %1489 = vst.msk [vmem:[%s297 + $0x78] sm:$0xff] %vm584, %v1473
        %s1490 = sand.u32 %s184, 1
        %s1491 = scalar_lea.sflag [#allocation4], %s1490
        %s1492 = sand.u32 %s184, 1
        %s1493 = smul.addr %s1492, 128
        %s1494 = scalar_lea.vmem [#allocation5], %s1493
        // Predicated region
        $region53: #{tpu_custom_call.1} parent=47 // pred_check
          %p1495 = pneg %p194
        $region54: #{tpu_custom_call.1} parent=47 // pred_check_branch
          %1497 = sbr.rel (%p1495) target = $region56
        $region55: #{tpu_custom_call.1} parent=47 // pred_region
          %s1498 = smul.u32 8, %s24
          %s1500 = ssub.s32 2048, 2048
          %1501 = vsyncadd %s1491, %s1500
          %s1502 = smul.addr %s1498, 2
          %s1503 = smul.addr %s1502, 128
          %s1504 = scalar_lea.hbm %s7, %s1503
          %s1505 = sshll.u32 %s1494, 4
          %s1506 = int_to_ptr.vmem [resolvable:$true] %s1505
          %1511 = dma.vmem_to_hbm [thread:$0]  %s1506, 2048, %s1504, %s1491, 128, 128, 8
        $region56: #{tpu_custom_call.1} parent=47 // pred_fallthru
          _
      $region48: #{tpu_custom_call.1} parent=5 // pred_fallthru
        _
      %p1512 = scmp.le.s32.totalorder 2, %s19
      // Predicated region
      $region57: #{tpu_custom_call.1} parent=5 // pred_check
        %p1513 = pneg %p1512
      $region58: #{tpu_custom_call.1} parent=5 // pred_check_branch
        %1515 = sbr.rel (%p1513) target = $region60
      $region59: #{tpu_custom_call.1} parent=5 // pred_region
        %s1516 = ssub.s32 %s19, 2
        // Predicated region
        $region61: #{tpu_custom_call.1} parent=59 // pred_check
          %p1517 = pneg %p200
        $region62: #{tpu_custom_call.1} parent=59 // pred_check_branch
          %1519 = sbr.rel (%p1517) target = $region64
        $region63: #{tpu_custom_call.1} parent=59 // pred_region
          %s1520 = sand.u32 %s185, 1
          %s1521 = scalar_lea.sflag [#allocation4], %s1520
          %s1522 = sand.u32 %s185, 1
          %s1523 = smul.addr %s1522, 128
          %s1524 = scalar_lea.vmem [#allocation5], %s1523
          %1525 = dma.done %s1521, 2048
        $region64: #{tpu_custom_call.1} parent=59 // pred_fallthru
          _
      $region60: #{tpu_custom_call.1} parent=5 // pred_fallthru
        _
    $region6: #{tpu_custom_call.1} parent=1 // loop_footer
      %s23 = sadd.s32 1, %s19
    $region7: #{tpu_custom_call.1} parent=1 // loop_footer_branch
      %18 = sbr.rel target = $region3
    $region8: #{tpu_custom_call.1} parent=1 // loop_exit
      _
    %1526 = vsyncpa [#allocation3], 1
    %s1527 = scalar_lea.sflag [#allocation3], 1
    %1528 = vsyncpa %s1527, 1
    %1529 = vsyncpa [#allocation4], 1
    %s1530 = scalar_lea.sflag [#allocation4], 1
    %1531 = vsyncpa %s1530, 1

</llo_original>
